<compile_context>
chip_gen: v7x
topology: tpu7x:2x2x1
jax: 0.10.0
libtpu: 0.0.40
codegen_flags: <defaults>
</compile_context>

<pallas_src>
import jax
import jax.numpy as jnp
from jax.experimental import pallas as pl
from jax.experimental.pallas import tpu as pltpu


# ----------------------------------------------------------------------------
# Helpers (glue, plain JAX)
# ----------------------------------------------------------------------------
def conv_identity_params(in_spatial, desired_kernel):
    """Mimic util.conv_identity_params: pick (kernel, pad) so that a stride-1
    convolution / unfold preserves the spatial size (out == in). Requires an
    odd kernel; even requests are reduced to the next smaller odd value."""
    k = min(desired_kernel, in_spatial)
    if k % 2 == 0:
        k = max(1, k - 1)
    pad = (k - 1) // 2
    return k, pad


def unfold_nchw(x, k, pad):
    """torch.nn.Unfold(kernel_size=k, padding=pad) on NCHW input.
    Returns (N, C*k*k, L) with torch's ordering: feature index = c*k*k + i*k + j,
    spatial positions flattened row-major."""
    N, C, H, W = x.shape
    xp = jnp.pad(x, ((0, 0), (0, 0), (pad, pad), (pad, pad)))
    Ho = H + 2 * pad - k + 1
    Wo = W + 2 * pad - k + 1
    patches = []
    for i in range(k):
        for j in range(k):
            patches.append(xp[:, :, i:i + Ho, j:j + Wo])      # (N, C, Ho, Wo)
    p = jnp.stack(patches, axis=2)                            # (N, C, k*k, Ho, Wo)
    return p.reshape(N, C * k * k, Ho * Wo)                   # (N, C*k*k, L)


def _round_up(x, m):
    return ((x + m - 1) // m) * m


# ----------------------------------------------------------------------------
# Pallas kernels
# ----------------------------------------------------------------------------
def _ewc_matmul_kernel(w_ref, x_ref, o_ref):
    # Single contraction block: one MXU matmul, result written straight to HBM tile.
    # w_ref: (M_pad, K_pad) bf16 (resident across all S-tiles)
    # x_ref: (K_pad, TS)    bf16
    # o_ref: (M_pad, TS)    f32
    o_ref[...] = jnp.dot(w_ref[...], x_ref[...],
                         preferred_element_type=jnp.float32)


def _ewc_matmul_acc_kernel(w_ref, x_ref, o_ref, acc_ref):
    # K-tiled contraction: accumulate in f32 VMEM scratch, write on last K step.
    kk = pl.program_id(1)

    @pl.when(kk == 0)
    def _():
        acc_ref[...] = jnp.zeros_like(acc_ref)

    acc_ref[...] += jnp.dot(w_ref[...], x_ref[...],
                            preferred_element_type=jnp.float32)

    @pl.when(kk == pl.num_programs(1) - 1)
    def _():
        o_ref[...] = acc_ref[...]


# ----------------------------------------------------------------------------
# Forward pass
# ----------------------------------------------------------------------------
def elegant_weighted_convolution(x, conv, out_edge, mask, *, kernel_size, pad,
                                 normalize_conv=True, inject_noise=True,
                                 noise_key=None, s_tile=2048, k_tile=2048):
    """Forward pass of ElegantWeightedConvolution.

    x:        (N, C, H, W)        activations in [0, 1]
    conv:     (N, N, C, C, k, k)  per-edge conv weights
    out_edge: (N, N)              edge gains
    mask:     (N, N)              edge mask
    returns:  (N, C, H, W)
    """
    N, C, H, W = x.shape
    k = kernel_size
    S = H * W
    CK = C * k * k
    M = N * C            # fused (v, o)        -> matmul rows
    K = N * CK           # fused (u, c) reduce -> matmul contraction

    # --- glue: unfold (im2col) ------------------------------------------------
    # TODO(synk): the PyTorch module prints a WARN if x is outside [0,1]; that
    # runtime print has no kernel-side equivalent and is omitted.
    xufld = unfold_nchw(x, k, pad)                            # (N_u, CK, S)
    xbig = xufld.reshape(K, S)                                # row index = u*CK + c

    # --- glue: weight prep (noise -> abs -> softmax -> mask), then fold the
    #     masked edge gain and the 1/N mean into the weights so the kernel is a
    #     pure matmul. ---------------------------------------------------------
    if inject_noise:
        noise = 0.001 * jax.random.normal(noise_key, conv.shape, dtype=conv.dtype)
        conv = conv + noise
    w = jnp.abs(conv.reshape(N, N, C, CK))                    # (u, v, o, c)
    if normalize_conv:
        w = jax.nn.softmax(w, axis=3)
    w = w * mask[:, :, None, None]
    w = w * ((out_edge * mask) / N)[:, :, None, None]         # fold edge gain + mean
    wbig = jnp.transpose(w, (1, 2, 0, 3)).reshape(M, K)       # rows v*C+o, cols u*CK+c

    # --- pad to lane/sublane-dense shapes, cast operands to bf16 ---------------
    K_pad = _round_up(K, 128)                                 # lane-dense contraction
    M_pad = _round_up(M, 16)                                  # bf16 sublane packing
    ts = min(_round_up(s_tile, 128), _round_up(S, 128))       # S-tile (lane multiple)
    S_pad = _round_up(S, ts)
    tk = min(_round_up(k_tile, 128), K_pad)                   # K-tile (lane multiple)
    K_pad = _round_up(K_pad, tk)

    wbig = jnp.pad(wbig.astype(jnp.bfloat16),
                   ((0, M_pad - M), (0, K_pad - K)))
    xbig = jnp.pad(xbig.astype(jnp.bfloat16),
                   ((0, K_pad - K), (0, S_pad - S)))

    n_s = S_pad // ts
    n_k = K_pad // tk

    if n_k == 1:
        # Weights fit resident: one matmul per S-tile, no scratch, no epilogue.
        out = pl.pallas_call(
            _ewc_matmul_kernel,
            out_shape=jax.ShapeDtypeStruct((M_pad, S_pad), jnp.float32),
            grid=(n_s,),
            in_specs=[
                pl.BlockSpec((M_pad, K_pad), lambda j: (0, 0)),  # weights resident
                pl.BlockSpec((K_pad, ts), lambda j: (0, j)),     # S-tile of patches
            ],
            out_specs=pl.BlockSpec((M_pad, ts), lambda j: (0, j)),
            compiler_params=pltpu.CompilerParams(
                dimension_semantics=("parallel",)),
        )(wbig, xbig)
    else:
        # Large contraction: tile K as the innermost ("arbitrary") reduction axis.
        out = pl.pallas_call(
            _ewc_matmul_acc_kernel,
            out_shape=jax.ShapeDtypeStruct((M_pad, S_pad), jnp.float32),
            grid=(n_s, n_k),
            in_specs=[
                pl.BlockSpec((M_pad, tk), lambda j, kk: (0, kk)),
                pl.BlockSpec((tk, ts), lambda j, kk: (kk, j)),
            ],
            out_specs=pl.BlockSpec((M_pad, ts), lambda j, kk: (0, j)),
            scratch_shapes=[pltpu.VMEM((M_pad, ts), jnp.float32)],
            compiler_params=pltpu.CompilerParams(
                dimension_semantics=("parallel", "arbitrary")),
        )(wbig, xbig)

    return out[:M, :S].reshape(N, C, H, W)


# ----------------------------------------------------------------------------
# Pure-JAX reference (mirrors the PyTorch forward) for a correctness check
# ----------------------------------------------------------------------------
def reference_forward(x, conv, out_edge, mask, *, kernel_size, pad,
                      normalize_conv, inject_noise, noise_key):
    N, C, H, W = x.shape
    k = kernel_size
    CK = C * k * k
    xufld = unfold_nchw(x, k, pad)                            # (u, c, s)
    if inject_noise:
        noise = 0.001 * jax.random.normal(noise_key, conv.shape, dtype=conv.dtype)
    else:
        noise = jnp.zeros_like(conv)
    w = jnp.abs((conv + noise).reshape(N, N, C, CK))
    if normalize_conv:
        w = jax.nn.softmax(w, axis=3)
    w = w * mask[:, :, None, None]
    conv_res = jnp.einsum('ucs,uvoc->uvos', xufld, w)
    conv_res = conv_res * (out_edge * mask)[:, :, None, None]
    return conv_res.mean(axis=0).reshape(N, C, H, W)


# ----------------------------------------------------------------------------
if __name__ == "__main__":
    # Small shapes consistent with the module
    num_nodes = 4
    channels = 4
    spatial1 = spatial2 = 16
    desired_kernel = 3

    kernel_size, pad = conv_identity_params(spatial1, desired_kernel)

    key = jax.random.PRNGKey(0)
    k_x, k_conv, k_edge, k_noise = jax.random.split(key, 4)

    # Input activations in [0, 1] (as the module expects)
    x = jax.random.uniform(
        k_x, (num_nodes, channels, spatial1, spatial2), dtype=jnp.float32)

    # Parameters (deterministic, matching __init__ shapes / init schemes)
    # mask: ones with the first column zeroed
    mask = jnp.ones((num_nodes, num_nodes), dtype=jnp.float32).at[:, 0].set(0.0)

    # conv: xavier_normal_ on (N, N, C, C, k, k)
    fan_rf = channels * channels * kernel_size * kernel_size
    fan_in = num_nodes * fan_rf
    fan_out = num_nodes * fan_rf
    xavier_std = (2.0 / (fan_in + fan_out)) ** 0.5
    conv = xavier_std * jax.random.normal(
        k_conv,
        (num_nodes, num_nodes, channels, channels, kernel_size, kernel_size),
        dtype=jnp.float32)

    # out_edge: N(0, 0.1) * mask
    out_edge = 0.1 * jax.random.normal(
        k_edge, (num_nodes, num_nodes), dtype=jnp.float32) * mask

    out = elegant_weighted_convolution(
        x, conv, out_edge, mask,
        kernel_size=kernel_size, pad=pad,
        normalize_conv=True, inject_noise=True, noise_key=k_noise)
    out = jax.block_until_ready(out)

    ref = reference_forward(
        x, conv, out_edge, mask,
        kernel_size=kernel_size, pad=pad,
        normalize_conv=True, inject_noise=True, noise_key=k_noise)
    ref = jax.block_until_ready(ref)

    assert out.shape == (num_nodes, channels, spatial1, spatial2)
    # bf16 operands with f32 accumulation -> loosen the f32 tolerance
    max_err = jnp.max(jnp.abs(out - ref))
    assert jnp.allclose(out, ref, atol=2e-3, rtol=2e-2), (
        f"max abs err {max_err}")

    print("KERNEL_OK")
</pallas_src>

<mosaic_0001>
module attributes {stable_mosaic.version = 11 : i64} {
  func.func @_ewc_matmul_kernel(%arg0: i32, %arg1: memref<16x256xbf16, #tpu.memory_space<vmem>>, %arg2: memref<256x256xbf16, #tpu.memory_space<vmem>>, %arg3: memref<16x256xf32, #tpu.memory_space<vmem>>) attributes {dimension_semantics = [#tpu.dimension_semantics<parallel>], iteration_bounds = array<i64: 1>, scalar_prefetch = 0 : i64, scratch_operands = 0 : i64, tpu.core_type = #tpu.core_type<tc>, window_params = [{pipeline_mode = #tpu.pipeline_mode<synchronous>, transform_indices = @transform_0, window_bounds = array<i64: 16, 256>}, {transform_indices = @transform_1, window_bounds = array<i64: 256, 256>}, {transform_indices = @transform_2, window_bounds = array<i64: 16, 256>}]} {
    %c0 = arith.constant 0 : index
    %c0_0 = arith.constant 0 : index
    %0 = vector.load %arg1[%c0, %c0_0] : memref<16x256xbf16, #tpu.memory_space<vmem>>, vector<16x256xbf16>
    %c0_1 = arith.constant 0 : index
    %c0_2 = arith.constant 0 : index
    %1 = vector.load %arg2[%c0_1, %c0_2] : memref<256x256xbf16, #tpu.memory_space<vmem>>, vector<256x256xbf16>
    %cst = arith.constant dense<0.000000e+00> : vector<16x256xf32>
    %2 = tpu.matmul %0, %1, %cst {dimension_numbers = #tpu.dot_dimension_numbers<[1], [0], [0], [1], [0, 0, 1, 1], [], []>} : vector<16x256xbf16>, vector<256x256xbf16>, vector<16x256xf32> -> vector<16x256xf32>
    %c0_3 = arith.constant 0 : index
    %c0_4 = arith.constant 0 : index
    %3 = vector.load %arg3[%c0_3, %c0_4] : memref<16x256xf32, #tpu.memory_space<vmem>>, vector<16x256xf32>
    tpu.vector_store %arg3[%c0_3, %c0_4], %2 {strides = array<i32>} : memref<16x256xf32, #tpu.memory_space<vmem>>, vector<16x256xf32>,
    return
  }
  func.func @transform_0(%arg0: i32) -> (i32, i32) {
    %c0_i32 = arith.constant 0 : i32
    %c0_i32_0 = arith.constant 0 : i32
    %c0_i32_1 = arith.constant 0 : i32
    return %c0_i32, %c0_i32_0 : i32, i32
  }
  func.func @transform_1(%arg0: i32) -> (i32, i32) {
    %c0_i32 = arith.constant 0 : i32
    %c0_i32_0 = arith.constant 0 : i32
    return %c0_i32, %arg0 : i32, i32
  }
  func.func @transform_2(%arg0: i32) -> (i32, i32) {
    %c0_i32 = arith.constant 0 : i32
    %c0_i32_0 = arith.constant 0 : i32
    return %c0_i32, %arg0 : i32, i32
  }
}

</mosaic_0001>

<llo_original>
// kernel: tpu_custom_call.1
$region0: #{tpu_custom_call.1}
  #allocation0 [shape = 'u32[]', space=smem, size = 0x4, offset = 0x4, fixed_abs, tag = 'smem constant byte address 0x4 - core index']
  #allocation1 [shape = 'u32[144,128]{1,0:T(1,128)}', space=vmem, size = 0x12000, scoped, tag = 'internal scratch']
  %s0 = inlined_call_operand.hbm [shape: bf16[16,256], index: 0, kind: input, shape index: {}]
  %s1 = inlined_call_operand.hbm [shape: bf16[256,256], index: 1, kind: input, shape index: {}]
  %s2 = inlined_call_operand.hbm [shape: f32[16,256], index: 2, kind: output, shape index: {}]
  %s3 = sld [smem:[#allocation0]]
  $region26: #{tpu_custom_call.1} parent=0
    _
  %s5 = ssub.s32 1, %s3
  %s6 = scalar_select 0, %s5, %s3
  $region1: #{tpu_custom_call.1} parent=0
    #allocation2 [shape = 'u8[8192]{0}', space=vmem, size = 0x2000, scoped, tag = 'input window, operand 0, single buffered']
    #allocation3 [shape = 's32[1]{0}', space=sflag, size = 0x4, scoped, tag = 'scoped memory for tpu_custom_call.1']
    #allocation4 [shape = 's32[1]{0}', space=sflag, size = 0x4, scoped, tag = 'scoped memory for tpu_custom_call.1']
    #allocation5 [shape = 'u8[131072]{0}', space=vmem, size = 0x20000, scoped, tag = 'input window, operand 1, single buffered']
    #allocation6 [shape = 's32[1]{0}', space=sflag, size = 0x4, scoped, tag = 'scoped memory for tpu_custom_call.1']
    #allocation7 [shape = 'u8[16384]{0}', space=vmem, size = 0x4000, scoped, tag = 'output window, operand 0, single buffered']
    %7 = vsyncpa [#allocation3], 0
    %8 = vsyncpa [#allocation6], 0
    %9 = vsyncpa [#allocation4], 0
    // Predicated region
    $region2: #{tpu_custom_call.1} parent=1 // pred_check
      _
    $region3: #{tpu_custom_call.1} parent=1 // pred_check_branch
      %11 = sbr.rel (0) target = $region5
    $region4: #{tpu_custom_call.1} parent=1 // pred_region
      %s13 = ssub.s32 256, 256
      %14 = vsyncadd [#allocation3], %s13
      %s15 = sshll.u32 [#allocation2], 4
      %s16 = int_to_ptr.vmem [resolvable:$true] %s15
      %21 = dma.hbm_to_vmem [thread:$0]  %s0, 256, %s16, [#allocation3], 128, 128, 8
    $region5: #{tpu_custom_call.1} parent=1 // pred_fallthru
      _
    // Predicated region
    $region6: #{tpu_custom_call.1} parent=1 // pred_check
      _
    $region7: #{tpu_custom_call.1} parent=1 // pred_check_branch
      %23 = sbr.rel (0) target = $region9
    $region8: #{tpu_custom_call.1} parent=1 // pred_region
      %s25 = ssub.s32 4096, 4096
      %26 = vsyncadd [#allocation6], %s25
      %s27 = sshll.u32 [#allocation5], 4
      %s28 = int_to_ptr.vmem [resolvable:$true] %s27
      %33 = dma.hbm_to_vmem [thread:$0]  %s1, 4096, %s28, [#allocation6], 128, 128, 8
    $region9: #{tpu_custom_call.1} parent=1 // pred_fallthru
      _
    // Predicated region
    $region10: #{tpu_custom_call.1} parent=1 // pred_check
      _
    $region11: #{tpu_custom_call.1} parent=1 // pred_check_branch
      %35 = sbr.rel (0) target = $region13
    $region12: #{tpu_custom_call.1} parent=1 // pred_region
      %36 = dma.done [#allocation3], 256
    $region13: #{tpu_custom_call.1} parent=1 // pred_fallthru
      _
    // Predicated region
    $region14: #{tpu_custom_call.1} parent=1 // pred_check
      _
    $region15: #{tpu_custom_call.1} parent=1 // pred_check_branch
      %38 = sbr.rel (0) target = $region17
    $region16: #{tpu_custom_call.1} parent=1 // pred_region
      %39 = dma.done [#allocation6], 4096
    $region17: #{tpu_custom_call.1} parent=1 // pred_fallthru
      _
    %v40 = vld [vmem:[#allocation2] sm:$0xff]
    %v41 = vld [vmem:[#allocation2 + $0x8] sm:$0xff]
    %v42 = vld [vmem:[#allocation5] sm:$0xff]
    %v43 = vld [vmem:[#allocation5 + $0x8] sm:$0xff]
    %v44 = vld [vmem:[#allocation5 + $0x10] sm:$0xff]
    %v45 = vld [vmem:[#allocation5 + $0x18] sm:$0xff]
    %v46 = vld [vmem:[#allocation5 + $0x20] sm:$0xff]
    %v47 = vld [vmem:[#allocation5 + $0x28] sm:$0xff]
    %v48 = vld [vmem:[#allocation5 + $0x30] sm:$0xff]
    %v49 = vld [vmem:[#allocation5 + $0x38] sm:$0xff]
    %v50 = vld [vmem:[#allocation5 + $0x40] sm:$0xff]
    %v51 = vld [vmem:[#allocation5 + $0x48] sm:$0xff]
    %v52 = vld [vmem:[#allocation5 + $0x50] sm:$0xff]
    %v53 = vld [vmem:[#allocation5 + $0x58] sm:$0xff]
    %v54 = vld [vmem:[#allocation5 + $0x60] sm:$0xff]
    %v55 = vld [vmem:[#allocation5 + $0x68] sm:$0xff]
    %v56 = vld [vmem:[#allocation5 + $0x70] sm:$0xff]
    %v57 = vld [vmem:[#allocation5 + $0x78] sm:$0xff]
    %v58 = vld [vmem:[#allocation5 + $0x80] sm:$0xff]
    %v59 = vld [vmem:[#allocation5 + $0x88] sm:$0xff]
    %v60 = vld [vmem:[#allocation5 + $0x90] sm:$0xff]
    %v61 = vld [vmem:[#allocation5 + $0x98] sm:$0xff]
    %v62 = vld [vmem:[#allocation5 + $0xa0] sm:$0xff]
    %v63 = vld [vmem:[#allocation5 + $0xa8] sm:$0xff]
    %v64 = vld [vmem:[#allocation5 + $0xb0] sm:$0xff]
    %v65 = vld [vmem:[#allocation5 + $0xb8] sm:$0xff]
    %v66 = vld [vmem:[#allocation5 + $0xc0] sm:$0xff]
    %v67 = vld [vmem:[#allocation5 + $0xc8] sm:$0xff]
    %v68 = vld [vmem:[#allocation5 + $0xd0] sm:$0xff]
    %v69 = vld [vmem:[#allocation5 + $0xd8] sm:$0xff]
    %v70 = vld [vmem:[#allocation5 + $0xe0] sm:$0xff]
    %v71 = vld [vmem:[#allocation5 + $0xe8] sm:$0xff]
    %v72 = vld [vmem:[#allocation5 + $0xf0] sm:$0xff]
    %v73 = vld [vmem:[#allocation5 + $0xf8] sm:$0xff]
    %v76 = vunpack.c.l.b16 %v40
    %v77 = vunpack.c.h.b16 %v40
    %v78 = vunpack.c.l.b16 %v41
    %v79 = vunpack.c.h.b16 %v41
    %v80 = vpack.c.b16 %v78, %v76
    %v81 = vpack.c.b16 %v79, %v77
    %v116 = vunpack.c.l.b16 %v42
    %v117 = vunpack.c.h.b16 %v42
    %v118 = vunpack.c.l.b16 %v43
    %v119 = vunpack.c.h.b16 %v43
    %v120 = vunpack.c.l.b16 %v44
    %v121 = vunpack.c.h.b16 %v44
    %v122 = vunpack.c.l.b16 %v45
    %v123 = vunpack.c.h.b16 %v45
    %v124 = vunpack.c.l.b16 %v46
    %v125 = vunpack.c.h.b16 %v46
    %v126 = vunpack.c.l.b16 %v47
    %v127 = vunpack.c.h.b16 %v47
    %v128 = vunpack.c.l.b16 %v48
    %v129 = vunpack.c.h.b16 %v48
    %v130 = vunpack.c.l.b16 %v49
    %v131 = vunpack.c.h.b16 %v49
    %v132 = vunpack.c.l.b16 %v50
    %v133 = vunpack.c.h.b16 %v50
    %v134 = vunpack.c.l.b16 %v51
    %v135 = vunpack.c.h.b16 %v51
    %v136 = vunpack.c.l.b16 %v52
    %v137 = vunpack.c.h.b16 %v52
    %v138 = vunpack.c.l.b16 %v53
    %v139 = vunpack.c.h.b16 %v53
    %v140 = vunpack.c.l.b16 %v54
    %v141 = vunpack.c.h.b16 %v54
    %v142 = vunpack.c.l.b16 %v55
    %v143 = vunpack.c.h.b16 %v55
    %v144 = vunpack.c.l.b16 %v56
    %v145 = vunpack.c.h.b16 %v56
    %v146 = vunpack.c.l.b16 %v57
    %v147 = vunpack.c.h.b16 %v57
    %v148 = vunpack.c.l.b16 %v58
    %v149 = vunpack.c.h.b16 %v58
    %v150 = vunpack.c.l.b16 %v59
    %v151 = vunpack.c.h.b16 %v59
    %v152 = vunpack.c.l.b16 %v60
    %v153 = vunpack.c.h.b16 %v60
    %v154 = vunpack.c.l.b16 %v61
    %v155 = vunpack.c.h.b16 %v61
    %v156 = vunpack.c.l.b16 %v62
    %v157 = vunpack.c.h.b16 %v62
    %v158 = vunpack.c.l.b16 %v63
    %v159 = vunpack.c.h.b16 %v63
    %v160 = vunpack.c.l.b16 %v64
    %v161 = vunpack.c.h.b16 %v64
    %v162 = vunpack.c.l.b16 %v65
    %v163 = vunpack.c.h.b16 %v65
    %v164 = vunpack.c.l.b16 %v66
    %v165 = vunpack.c.h.b16 %v66
    %v166 = vunpack.c.l.b16 %v67
    %v167 = vunpack.c.h.b16 %v67
    %v168 = vunpack.c.l.b16 %v68
    %v169 = vunpack.c.h.b16 %v68
    %v170 = vunpack.c.l.b16 %v69
    %v171 = vunpack.c.h.b16 %v69
    %v172 = vunpack.c.l.b16 %v70
    %v173 = vunpack.c.h.b16 %v70
    %v174 = vunpack.c.l.b16 %v71
    %v175 = vunpack.c.h.b16 %v71
    %v176 = vunpack.c.l.b16 %v72
    %v177 = vunpack.c.h.b16 %v72
    %v178 = vunpack.c.l.b16 %v73
    %v179 = vunpack.c.h.b16 %v73
    %v180 = vpack.c.b16 %v118, %v116
    %v181 = vpack.c.b16 %v119, %v117
    %v182 = vpack.c.b16 %v122, %v120
    %v183 = vpack.c.b16 %v123, %v121
    %v184 = vpack.c.b16 %v126, %v124
    %v185 = vpack.c.b16 %v127, %v125
    %v186 = vpack.c.b16 %v130, %v128
    %v187 = vpack.c.b16 %v131, %v129
    %v188 = vpack.c.b16 %v134, %v132
    %v189 = vpack.c.b16 %v135, %v133
    %v190 = vpack.c.b16 %v138, %v136
    %v191 = vpack.c.b16 %v139, %v137
    %v192 = vpack.c.b16 %v142, %v140
    %v193 = vpack.c.b16 %v143, %v141
    %v194 = vpack.c.b16 %v146, %v144
    %v195 = vpack.c.b16 %v147, %v145
    %v196 = vpack.c.b16 %v150, %v148
    %v197 = vpack.c.b16 %v151, %v149
    %v198 = vpack.c.b16 %v154, %v152
    %v199 = vpack.c.b16 %v155, %v153
    %v200 = vpack.c.b16 %v158, %v156
    %v201 = vpack.c.b16 %v159, %v157
    %v202 = vpack.c.b16 %v162, %v160
    %v203 = vpack.c.b16 %v163, %v161
    %v204 = vpack.c.b16 %v166, %v164
    %v205 = vpack.c.b16 %v167, %v165
    %v206 = vpack.c.b16 %v170, %v168
    %v207 = vpack.c.b16 %v171, %v169
    %v208 = vpack.c.b16 %v174, %v172
    %v209 = vpack.c.b16 %v175, %v173
    %v210 = vpack.c.b16 %v178, %v176
    %v211 = vpack.c.b16 %v179, %v177
    %244 = vmatprep.subr.bf16.mxu0 %v181
    %245 = vmatpush1.bf16.msra.mxu0 %v180
    %246 = vmatprep.subr.bf16.mxu0 %v183
    %247 = vmatpush1.bf16.msra.mxu0 %v182
    %248 = vmatprep.subr.bf16.mxu0 %v185
    %249 = vmatpush1.bf16.msra.mxu0 %v184
    %250 = vmatprep.subr.bf16.mxu0 %v187
    %251 = vmatpush1.bf16.msra.mxu0 %v186
    %252 = vmatprep.subr.bf16.mxu0 %v189
    %253 = vmatpush1.bf16.msra.mxu0 %v188
    %254 = vmatprep.subr.bf16.mxu0 %v191
    %255 = vmatpush1.bf16.msra.mxu0 %v190
    %256 = vmatprep.subr.bf16.mxu0 %v193
    %257 = vmatpush1.bf16.msra.mxu0 %v192
    %258 = vmatprep.subr.bf16.mxu0 %v195
    %259 = vmatpush1.bf16.msra.mxu0 %v194
    %260 = vmatprep.subr.bf16.mxu0 %v197
    %261 = vmatpush1.bf16.msra.mxu0 %v196
    %262 = vmatprep.subr.bf16.mxu0 %v199
    %263 = vmatpush1.bf16.msra.mxu0 %v198
    %264 = vmatprep.subr.bf16.mxu0 %v201
    %265 = vmatpush1.bf16.msra.mxu0 %v200
    %266 = vmatprep.subr.bf16.mxu0 %v203
    %267 = vmatpush1.bf16.msra.mxu0 %v202
    %268 = vmatprep.subr.bf16.mxu0 %v205
    %269 = vmatpush1.bf16.msra.mxu0 %v204
    %270 = vmatprep.subr.bf16.mxu0 %v207
    %271 = vmatpush1.bf16.msra.mxu0 %v206
    %272 = vmatprep.subr.bf16.mxu0 %v209
    %273 = vmatpush1.bf16.msra.mxu0 %v208
    %274 = vmatprep.subr.bf16.mxu0 %v211
    %275 = vmatpush1.bf16.msra.mxu0 %v210
    %276 = vmatprep.mubr.bf16.mxu0 %v81
    %277 = vmatmul.mubr.bf16.gmra.mrb[0].mxu0 %v80
    %v278 = vpop.f32.mrb[0].mxu0
    %v279 = vadd.f32 0.0, %v278
    %v280 = vpop.f32.mrb[0].mxu0
    %v281 = vadd.f32 0.0, %v280
    %v282 = vpop.f32.mrb[0].mxu0
    %v283 = vadd.f32 0.0, %v282
    %v284 = vpop.f32.mrb[0].mxu0
    %v285 = vadd.f32 0.0, %v284
    %286 = vdwg.mxu0
    %287 = vst [vmem:[#allocation7] sm:$0xff] %v279
    %288 = vst [vmem:[#allocation7 + $0x8] sm:$0xff] %v281
    %289 = vst [vmem:[#allocation7 + $0x10] sm:$0xff] %v283
    %290 = vst [vmem:[#allocation7 + $0x18] sm:$0xff] %v285
    // Predicated region
    $region18: #{tpu_custom_call.1} parent=1 // pred_check
      _
    $region19: #{tpu_custom_call.1} parent=1 // pred_check_branch
      %292 = sbr.rel (0) target = $region21
    $region20: #{tpu_custom_call.1} parent=1 // pred_region
      %s294 = ssub.s32 512, 512
      %295 = vsyncadd [#allocation4], %s294
      %s296 = sshll.u32 [#allocation7], 4
      %s297 = int_to_ptr.vmem [resolvable:$true] %s296
      %302 = dma.vmem_to_hbm [thread:$0]  %s297, 512, %s2, [#allocation4], 256, 256, 16
    $region21: #{tpu_custom_call.1} parent=1 // pred_fallthru
      _
    // Predicated region
    $region22: #{tpu_custom_call.1} parent=1 // pred_check
      _
    $region23: #{tpu_custom_call.1} parent=1 // pred_check_branch
      %304 = sbr.rel (0) target = $region25
    $region24: #{tpu_custom_call.1} parent=1 // pred_region
      %305 = dma.done [#allocation4], 512
    $region25: #{tpu_custom_call.1} parent=1 // pred_fallthru
      _
    %306 = vsyncpa [#allocation3], 1
    %307 = vsyncpa [#allocation6], 1
    %308 = vsyncpa [#allocation4], 1

</llo_original>
